<compile_context>
chip_gen: v7x
topology: tpu7x:2x2x1
jax: 0.10.0
libtpu: 0.0.40
codegen_flags: <defaults>
</compile_context>

<pallas_src>
import jax
import jax.numpy as jnp
from jax import lax
from jax.experimental import pallas as pl
from jax.experimental.pallas import tpu as pltpu


def _make_r_block_kernel(H, W, Cin, C1, C2):
    """Builds the fused conv3x3+ReLU -> conv3x3+ReLU kernel for fixed tile sizes."""

    def kernel(x_ref, a1_ref, b1_ref, a2_ref, b2_ref, o_ref, h_ref):
        # x_ref : (1, H+2, (W+2)*Cin)   zero-padded input, (w, cin) flattened on lanes
        # a1_ref: (3, (W+2)*Cin, W*C1)  banded conv1 weights (one matrix per kernel row)
        # b1_ref: (1, W*C1)             conv1 bias tiled to the lane layout
        # a2_ref: (3, (W+2)*C1, W*C2)   banded conv2 weights
        # b2_ref: (1, W*C2)             conv2 bias tiled to the lane layout
        # o_ref : (1, H, W*C2)          lane-dense output
        # h_ref : (H+2, (W+2)*C1) f32   VMEM scratch: padded intermediate activation

        def conv3x3_relu(src, a_ref, bias):
            # src: (H+2, (W+2)*cin) value. Returns ReLU(conv3x3(src)+bias), (H, W*cout) f32.
            acc = jnp.dot(src[0:H, :], a_ref[0], preferred_element_type=jnp.float32)
            acc = acc + jnp.dot(src[1:H + 1, :], a_ref[1],
                                preferred_element_type=jnp.float32)
            acc = acc + jnp.dot(src[2:H + 2, :], a_ref[2],
                                preferred_element_type=jnp.float32)
            return jnp.maximum(acc + bias, 0.0)

        # ---- conv1 + ReLU: result stays on-chip ----
        h1 = conv3x3_relu(x_ref[0], a1_ref, b1_ref[...])          # (H, W*C1) f32

        # Zero halo == 'same' zero padding for conv2. Re-zeroed every grid step (cheap
        # memset) so the kernel is correct under any megacore sharding of the batch axis.
        h_ref[...] = jnp.zeros(h_ref.shape, h_ref.dtype)
        h_ref[1:H + 1, C1:(W + 1) * C1] = h1

        # ---- conv2 + ReLU: straight to the lane-dense output ----
        y = conv3x3_relu(h_ref[...], a2_ref, b2_ref[...])         # (H, W*C2) f32
        o_ref[0] = y.astype(o_ref.dtype)

    return kernel


def _banded_conv_weights(wt, width):
    """(3, 3, Cin, Cout) conv weights -> (3, (width+2)*Cin, width*Cout) banded matrices.

    A[kh, (w+kw)*Cin + ci, w*Cout + co] == wt[kh, kw, ci, co] (zeros elsewhere), so one
    matmul of the padded input row-slab (H, (width+2)*Cin) with A[kh] applies all three
    kw taps of kernel row kh for every output column at once.
    """
    _, _, cin, cout = wt.shape
    eye = jnp.eye(width, dtype=wt.dtype)
    mats = []
    for kh in range(3):
        a = jnp.zeros(((width + 2) * cin, width * cout), wt.dtype)
        for kw in range(3):
            a = a.at[kw * cin:kw * cin + width * cin, :].add(jnp.kron(eye, wt[kh, kw]))
        mats.append(a)
    return jnp.stack(mats)


@jax.jit
def r_block_forward(params, x_nchw):
    """Forward of _r_block (Conv3x3 'same' -> ReLU -> Conv3x3 'same' -> ReLU), NCHW in/out."""
    w1, b1, w2, b2 = params["w1"], params["b1"], params["w2"], params["b2"]
    N, Cin, H, W = x_nchw.shape
    C1 = w1.shape[-1]
    C2 = w2.shape[-1]

    # NCHW -> NHWC, add the 1-pixel 'same' halo, flatten (w, c) onto lanes.
    x = jnp.transpose(x_nchw, (0, 2, 3, 1))
    x_pad = jnp.pad(x, ((0, 0), (1, 1), (1, 1), (0, 0)))
    x_flat = x_pad.reshape(N, H + 2, (W + 2) * Cin)

    a1 = _banded_conv_weights(w1, W)                      # (3, (W+2)*Cin, W*C1)
    a2 = _banded_conv_weights(w2, W)                      # (3, (W+2)*C1,  W*C2)
    b1t = jnp.tile(b1, W).reshape(1, W * C1)
    b2t = jnp.tile(b2, W).reshape(1, W * C2)

    kernel = _make_r_block_kernel(H, W, Cin, C1, C2)

    out = pl.pallas_call(
        kernel,
        out_shape=jax.ShapeDtypeStruct((N, H, W * C2), x.dtype),
        grid_spec=pltpu.PrefetchScalarGridSpec(
            num_scalar_prefetch=0,
            grid=(N,),
            in_specs=[
                pl.BlockSpec((1, H + 2, (W + 2) * Cin), lambda n: (n, 0, 0)),
                pl.BlockSpec((3, (W + 2) * Cin, W * C1), lambda n: (0, 0, 0)),
                pl.BlockSpec((1, W * C1), lambda n: (0, 0)),
                pl.BlockSpec((3, (W + 2) * C1, W * C2), lambda n: (0, 0, 0)),
                pl.BlockSpec((1, W * C2), lambda n: (0, 0)),
            ],
            out_specs=pl.BlockSpec((1, H, W * C2), lambda n: (n, 0, 0)),
            scratch_shapes=[pltpu.VMEM((H + 2, (W + 2) * C1), jnp.float32)],
        ),
        compiler_params=pltpu.CompilerParams(
            dimension_semantics=("parallel",),
        ),
    )(x_flat, a1, b1t, a2, b2t)

    out = out.reshape(N, H, W, C2)                        # un-flatten lanes
    return jnp.transpose(out, (0, 3, 1, 2))               # NHWC -> NCHW


def r_block_init(key, in_filters, nb_filters):
    """Deterministic parameter init mimicking nn.Conv2d default (Kaiming-uniform-ish)."""
    k1, k2, k3, k4 = jax.random.split(key, 4)
    fan_in1 = in_filters * 3 * 3
    fan_in2 = nb_filters * 3 * 3
    bound1 = 1.0 / jnp.sqrt(fan_in1)
    bound2 = 1.0 / jnp.sqrt(fan_in2)
    # weights stored as (kh, kw, Cin, Cout)
    w1 = jax.random.uniform(k1, (3, 3, in_filters, nb_filters),
                            jnp.float32, -bound1, bound1)
    b1 = jax.random.uniform(k2, (nb_filters,), jnp.float32, -bound1, bound1)
    w2 = jax.random.uniform(k3, (3, 3, nb_filters, nb_filters),
                            jnp.float32, -bound2, bound2)
    b2 = jax.random.uniform(k4, (nb_filters,), jnp.float32, -bound2, bound2)
    return dict(w1=w1, b1=b1, w2=w2, b2=b2)


def _reference_forward(params, x_nchw):
    """Pure-JAX reference (lax.conv) for correctness checking."""
    x = jnp.transpose(x_nchw, (0, 2, 3, 1))
    dn = lax.conv_dimension_numbers(x.shape, params["w1"].shape,
                                    ("NHWC", "HWIO", "NHWC"))
    h = lax.conv_general_dilated(x, params["w1"], (1, 1), "SAME",
                                 dimension_numbers=dn) + params["b1"]
    h = jnp.maximum(h, 0.0)
    y = lax.conv_general_dilated(h, params["w2"], (1, 1), "SAME",
                                 dimension_numbers=dn) + params["b2"]
    y = jnp.maximum(y, 0.0)
    return jnp.transpose(y, (0, 3, 1, 2))


if __name__ == "__main__":
    key = jax.random.PRNGKey(0)
    kx, kp = jax.random.split(key)

    N, Cin, H, W = 2, 4, 16, 16
    nb_filters = 8            # W * nb_filters = 128 -> lane-dense output / matmul N dim

    x = jax.random.normal(kx, (N, Cin, H, W), jnp.float32)
    params = r_block_init(kp, Cin, nb_filters)

    out = r_block_forward(params, x)
    out = jax.block_until_ready(out)

    ref = _reference_forward(params, x)
    assert out.shape == (N, nb_filters, H, W)
    assert jnp.allclose(out, ref, atol=1e-4, rtol=1e-4), \
        float(jnp.max(jnp.abs(out - ref)))

    print("KERNEL_OK")
</pallas_src>

<mosaic_0001>
module attributes {stable_mosaic.version = 11 : i64} {
  func.func @kernel(%arg0: i32, %arg1: memref<1x18x72xf32, #tpu.memory_space<vmem>>, %arg2: memref<3x72x128xf32, #tpu.memory_space<vmem>>, %arg3: memref<1x128xf32, #tpu.memory_space<vmem>>, %arg4: memref<3x144x128xf32, #tpu.memory_space<vmem>>, %arg5: memref<1x128xf32, #tpu.memory_space<vmem>>, %arg6: memref<1x16x128xf32, #tpu.memory_space<vmem>>, %arg7: memref<18x144xf32, #tpu.memory_space<vmem>>) attributes {dimension_semantics = [#tpu.dimension_semantics<parallel>], iteration_bounds = array<i64: 2>, scalar_prefetch = 0 : i64, scratch_operands = 1 : i64, tpu.core_type = #tpu.core_type<tc>, window_params = [{transform_indices = @transform_0, window_bounds = array<i64: 1, 18, 72>}, {pipeline_mode = #tpu.pipeline_mode<synchronous>, transform_indices = @transform_1, window_bounds = array<i64: 3, 72, 128>}, {pipeline_mode = #tpu.pipeline_mode<synchronous>, transform_indices = @transform_2, window_bounds = array<i64: 1, 128>}, {pipeline_mode = #tpu.pipeline_mode<synchronous>, transform_indices = @transform_3, window_bounds = array<i64: 3, 144, 128>}, {pipeline_mode = #tpu.pipeline_mode<synchronous>, transform_indices = @transform_4, window_bounds = array<i64: 1, 128>}, {transform_indices = @transform_5, window_bounds = array<i64: 1, 16, 128>}]} {
    %c0 = arith.constant 0 : index
    %c0_0 = arith.constant 0 : index
    %c0_1 = arith.constant 0 : index
    %0 = vector.load %arg1[%c0, %c0_0, %c0_1] : memref<1x18x72xf32, #tpu.memory_space<vmem>>, vector<1x18x72xf32>
    %1 = vector.shape_cast %0 : vector<1x18x72xf32> to vector<18x72xf32>
    %c0_2 = arith.constant 0 : index
    %c0_3 = arith.constant 0 : index
    %2 = vector.load %arg3[%c0_2, %c0_3] : memref<1x128xf32, #tpu.memory_space<vmem>>, vector<1x128xf32>
    %3 = vector.extract_strided_slice %1 {offsets = [0, 0], sizes = [16, 72], strides = [1, 1]} : vector<18x72xf32> to vector<16x72xf32>
    %c0_4 = arith.constant 0 : index
    %c0_5 = arith.constant 0 : index
    %c0_6 = arith.constant 0 : index
    %4 = vector.load %arg2[%c0_4, %c0_5, %c0_6] : memref<3x72x128xf32, #tpu.memory_space<vmem>>, vector<1x72x128xf32>
    %5 = vector.shape_cast %4 : vector<1x72x128xf32> to vector<72x128xf32>
    %cst = arith.constant dense<0.000000e+00> : vector<16x128xf32>
    %6 = tpu.matmul %3, %5, %cst {dimension_numbers = #tpu.dot_dimension_numbers<[1], [0], [0], [1], [0, 0, 1, 1], [], []>} : vector<16x72xf32>, vector<72x128xf32>, vector<16x128xf32> -> vector<16x128xf32>
    %7 = vector.extract_strided_slice %1 {offsets = [1, 0], sizes = [16, 72], strides = [1, 1]} : vector<18x72xf32> to vector<16x72xf32>
    %c1 = arith.constant 1 : index
    %c0_7 = arith.constant 0 : index
    %c0_8 = arith.constant 0 : index
    %8 = vector.load %arg2[%c1, %c0_7, %c0_8] : memref<3x72x128xf32, #tpu.memory_space<vmem>>, vector<1x72x128xf32>
    %9 = vector.shape_cast %8 : vector<1x72x128xf32> to vector<72x128xf32>
    %cst_9 = arith.constant dense<0.000000e+00> : vector<16x128xf32>
    %10 = tpu.matmul %7, %9, %cst_9 {dimension_numbers = #tpu.dot_dimension_numbers<[1], [0], [0], [1], [0, 0, 1, 1], [], []>} : vector<16x72xf32>, vector<72x128xf32>, vector<16x128xf32> -> vector<16x128xf32>
    %11 = arith.addf %6, %10 : vector<16x128xf32>
    %12 = vector.extract_strided_slice %1 {offsets = [2, 0], sizes = [16, 72], strides = [1, 1]} : vector<18x72xf32> to vector<16x72xf32>
    %c2 = arith.constant 2 : index
    %c0_10 = arith.constant 0 : index
    %c0_11 = arith.constant 0 : index
    %13 = vector.load %arg2[%c2, %c0_10, %c0_11] : memref<3x72x128xf32, #tpu.memory_space<vmem>>, vector<1x72x128xf32>
    %14 = vector.shape_cast %13 : vector<1x72x128xf32> to vector<72x128xf32>
    %cst_12 = arith.constant dense<0.000000e+00> : vector<16x128xf32>
    %15 = tpu.matmul %12, %14, %cst_12 {dimension_numbers = #tpu.dot_dimension_numbers<[1], [0], [0], [1], [0, 0, 1, 1], [], []>} : vector<16x72xf32>, vector<72x128xf32>, vector<16x128xf32> -> vector<16x128xf32>
    %16 = arith.addf %11, %15 : vector<16x128xf32>
    %17 = vector.broadcast %2 : vector<1x128xf32> to vector<16x128xf32>
    %18 = arith.addf %16, %17 : vector<16x128xf32>
    %cst_13 = arith.constant 0.000000e+00 : f32
    %19 = vector.broadcast %cst_13 : f32 to vector<16x128xf32>
    %20 = arith.maximumf %18, %19 : vector<16x128xf32>
    %cst_14 = arith.constant 0.000000e+00 : f32
    %21 = vector.broadcast %cst_14 : f32 to vector<18x144xf32>
    %c0_15 = arith.constant 0 : index
    %c0_16 = arith.constant 0 : index
    %22 = vector.load %arg7[%c0_15, %c0_16] : memref<18x144xf32, #tpu.memory_space<vmem>>, vector<18x144xf32>
    tpu.vector_store %arg7[%c0_15, %c0_16], %21 {strides = array<i32>} : memref<18x144xf32, #tpu.memory_space<vmem>>, vector<18x144xf32>,
    %c1_17 = arith.constant 1 : index
    %c8 = arith.constant 8 : index
    %23 = vector.load %arg7[%c1_17, %c8] : memref<18x144xf32, #tpu.memory_space<vmem>>, vector<16x128xf32>
    tpu.vector_store %arg7[%c1_17, %c8], %20 {strides = array<i32>} : memref<18x144xf32, #tpu.memory_space<vmem>>, vector<16x128xf32>,
    %c0_18 = arith.constant 0 : index
    %c0_19 = arith.constant 0 : index
    %24 = vector.load %arg7[%c0_18, %c0_19] : memref<18x144xf32, #tpu.memory_space<vmem>>, vector<18x144xf32>
    %c0_20 = arith.constant 0 : index
    %c0_21 = arith.constant 0 : index
    %25 = vector.load %arg5[%c0_20, %c0_21] : memref<1x128xf32, #tpu.memory_space<vmem>>, vector<1x128xf32>
    %26 = vector.extract_strided_slice %24 {offsets = [0, 0], sizes = [16, 144], strides = [1, 1]} : vector<18x144xf32> to vector<16x144xf32>
    %c0_22 = arith.constant 0 : index
    %c0_23 = arith.constant 0 : index
    %c0_24 = arith.constant 0 : index
    %27 = vector.load %arg4[%c0_22, %c0_23, %c0_24] : memref<3x144x128xf32, #tpu.memory_space<vmem>>, vector<1x144x128xf32>
    %28 = vector.shape_cast %27 : vector<1x144x128xf32> to vector<144x128xf32>
    %cst_25 = arith.constant dense<0.000000e+00> : vector<16x128xf32>
    %29 = tpu.matmul %26, %28, %cst_25 {dimension_numbers = #tpu.dot_dimension_numbers<[1], [0], [0], [1], [0, 0, 1, 1], [], []>} : vector<16x144xf32>, vector<144x128xf32>, vector<16x128xf32> -> vector<16x128xf32>
    %30 = vector.extract_strided_slice %24 {offsets = [1, 0], sizes = [16, 144], strides = [1, 1]} : vector<18x144xf32> to vector<16x144xf32>
    %c1_26 = arith.constant 1 : index
    %c0_27 = arith.constant 0 : index
    %c0_28 = arith.constant 0 : index
    %31 = vector.load %arg4[%c1_26, %c0_27, %c0_28] : memref<3x144x128xf32, #tpu.memory_space<vmem>>, vector<1x144x128xf32>
    %32 = vector.shape_cast %31 : vector<1x144x128xf32> to vector<144x128xf32>
    %cst_29 = arith.constant dense<0.000000e+00> : vector<16x128xf32>
    %33 = tpu.matmul %30, %32, %cst_29 {dimension_numbers = #tpu.dot_dimension_numbers<[1], [0], [0], [1], [0, 0, 1, 1], [], []>} : vector<16x144xf32>, vector<144x128xf32>, vector<16x128xf32> -> vector<16x128xf32>
    %34 = arith.addf %29, %33 : vector<16x128xf32>
    %35 = vector.extract_strided_slice %24 {offsets = [2, 0], sizes = [16, 144], strides = [1, 1]} : vector<18x144xf32> to vector<16x144xf32>
    %c2_30 = arith.constant 2 : index
    %c0_31 = arith.constant 0 : index
    %c0_32 = arith.constant 0 : index
    %36 = vector.load %arg4[%c2_30, %c0_31, %c0_32] : memref<3x144x128xf32, #tpu.memory_space<vmem>>, vector<1x144x128xf32>
    %37 = vector.shape_cast %36 : vector<1x144x128xf32> to vector<144x128xf32>
    %cst_33 = arith.constant dense<0.000000e+00> : vector<16x128xf32>
    %38 = tpu.matmul %35, %37, %cst_33 {dimension_numbers = #tpu.dot_dimension_numbers<[1], [0], [0], [1], [0, 0, 1, 1], [], []>} : vector<16x144xf32>, vector<144x128xf32>, vector<16x128xf32> -> vector<16x128xf32>
    %39 = arith.addf %34, %38 : vector<16x128xf32>
    %40 = vector.broadcast %25 : vector<1x128xf32> to vector<16x128xf32>
    %41 = arith.addf %39, %40 : vector<16x128xf32>
    %cst_34 = arith.constant 0.000000e+00 : f32
    %42 = vector.broadcast %cst_34 : f32 to vector<16x128xf32>
    %43 = arith.maximumf %41, %42 : vector<16x128xf32>
    %c0_35 = arith.constant 0 : index
    %c0_36 = arith.constant 0 : index
    %c0_37 = arith.constant 0 : index
    %44 = vector.load %arg6[%c0_35, %c0_36, %c0_37] : memref<1x16x128xf32, #tpu.memory_space<vmem>>, vector<1x16x128xf32>
    %45 = vector.shape_cast %44 : vector<1x16x128xf32> to vector<16x128xf32>
    %46 = vector.shape_cast %43 : vector<16x128xf32> to vector<1x16x128xf32>
    tpu.vector_store %arg6[%c0_35, %c0_36, %c0_37], %46 {strides = array<i32>} : memref<1x16x128xf32, #tpu.memory_space<vmem>>, vector<1x16x128xf32>,
    return
  }
  func.func @transform_0(%arg0: i32) -> (i32, i32, i32) {
    %c0_i32 = arith.constant 0 : i32
    %c0_i32_0 = arith.constant 0 : i32
    %c0_i32_1 = arith.constant 0 : i32
    return %arg0, %c0_i32, %c0_i32_0 : i32, i32, i32
  }
  func.func @transform_1(%arg0: i32) -> (i32, i32, i32) {
    %c0_i32 = arith.constant 0 : i32
    %c0_i32_0 = arith.constant 0 : i32
    %c0_i32_1 = arith.constant 0 : i32
    %c0_i32_2 = arith.constant 0 : i32
    return %c0_i32, %c0_i32_0, %c0_i32_1 : i32, i32, i32
  }
  func.func @transform_2(%arg0: i32) -> (i32, i32) {
    %c0_i32 = arith.constant 0 : i32
    %c0_i32_0 = arith.constant 0 : i32
    %c0_i32_1 = arith.constant 0 : i32
    return %c0_i32, %c0_i32_0 : i32, i32
  }
  func.func @transform_3(%arg0: i32) -> (i32, i32, i32) {
    %c0_i32 = arith.constant 0 : i32
    %c0_i32_0 = arith.constant 0 : i32
    %c0_i32_1 = arith.constant 0 : i32
    %c0_i32_2 = arith.constant 0 : i32
    return %c0_i32, %c0_i32_0, %c0_i32_1 : i32, i32, i32
  }
  func.func @transform_4(%arg0: i32) -> (i32, i32) {
    %c0_i32 = arith.constant 0 : i32
    %c0_i32_0 = arith.constant 0 : i32
    %c0_i32_1 = arith.constant 0 : i32
    return %c0_i32, %c0_i32_0 : i32, i32
  }
  func.func @transform_5(%arg0: i32) -> (i32, i32, i32) {
    %c0_i32 = arith.constant 0 : i32
    %c0_i32_0 = arith.constant 0 : i32
    %c0_i32_1 = arith.constant 0 : i32
    return %arg0, %c0_i32, %c0_i32_0 : i32, i32, i32
  }
}

</mosaic_0001>

<llo_original>
// kernel: tile.13
$region0: #{tile.13}
  #allocation0 [shape = 's32[1]{0}', space=sflag, size = 0x4, scoped, tag = 'scoped memory for tile.13']
  %s0 = inlined_call_operand.vmem [shape: f32[8], index: 0, kind: input, shape index: {}]
  %s1 = inlined_call_operand.vmem [shape: f32[16,8], index: 1, kind: output, shape index: {}]
  // Predicated region
  $region2: #{tile.13} parent=0 // pred_check
    _
  $region3: #{tile.13} parent=0 // pred_check_branch
    %3 = sbr.rel (0) target = $region5
  $region4: #{tile.13} parent=0 // pred_region
    _
  $region5: #{tile.13} parent=0 // pred_fallthru
    _
  %v4 = vld [vmem:[%s0] ss:$0 sm:$0xff]
  %5 = vst [vmem:[%s1] sm:$0xff] %v4
  %s6 = scalar_lea.vmem %s1, 8
  %7 = vst [vmem:[%s6] sm:$0xff] %v4

// kernel: tile.14
$region0: #{tile.14}
  %s0 = inlined_call_operand.vmem [shape: f32[16,8], index: 0, kind: input, shape index: {}]
  %s1 = inlined_call_operand.vmem [shape: f32[1,128], index: 1, kind: output, shape index: {}]
  $region1: #{tile.14} parent=0
    #allocation0 [shape = 'u8[4096]{0}', space=vmem, size = 0x1000, scoped, tag = 'scoped mem for output reshape']
    %v2 = vld [vmem:[%s0] sm:$0x1]
    %vm3 = vcmask 64512
    %4 = vst.msk [vmem:[#allocation0] sm:$0x1] %vm3, %v2
    %s5 = scalar_lea.vmem %s0, 15
    %v6 = vld [vmem:[%s5] sm:$0x1]
    %7 = vrot.lane.b32.xlu0 %v6, 120
    %v8 = vpop.permute.xlu0 %7
    %vm9 = vcmask 1048512
    %10 = vst.msk [vmem:[#allocation0] sm:$0x1] %vm9, %v8
    %s11 = scalar_lea.vmem %s0, 14
    %v12 = vld [vmem:[%s11] sm:$0x1]
    %13 = vrot.lane.b32.xlu0 %v12, 112
    %v14 = vpop.permute.xlu0 %13
    %vm15 = vcmask 982912
    %16 = vst.msk [vmem:[#allocation0] sm:$0x1] %vm15, %v14
    %s17 = scalar_lea.vmem %s0, 13
    %v18 = vld [vmem:[%s17] sm:$0x1]
    %19 = vrot.lane.b32.xlu0 %v18, 104
    %v20 = vpop.permute.xlu0 %19
    %vm21 = vcmask 917312
    %22 = vst.msk [vmem:[#allocation0] sm:$0x1] %vm21, %v20
    %s23 = scalar_lea.vmem %s0, 12
    %v24 = vld [vmem:[%s23] sm:$0x1]
    %25 = vrot.lane.b32.xlu0 %v24, 96
    %v26 = vpop.permute.xlu0 %25
    %vm27 = vcmask 851712
    %28 = vst.msk [vmem:[#allocation0] sm:$0x1] %vm27, %v26
    %s29 = scalar_lea.vmem %s0, 11
    %v30 = vld [vmem:[%s29] sm:$0x1]
    %31 = vrot.lane.b32.xlu0 %v30, 88
    %v32 = vpop.permute.xlu0 %31
    %vm33 = vcmask 786112
    %34 = vst.msk [vmem:[#allocation0] sm:$0x1] %vm33, %v32
    %s35 = scalar_lea.vmem %s0, 10
    %v36 = vld [vmem:[%s35] sm:$0x1]
    %37 = vrot.lane.b32.xlu0 %v36, 80
    %v38 = vpop.permute.xlu0 %37
    %vm39 = vcmask 720512
    %40 = vst.msk [vmem:[#allocation0] sm:$0x1] %vm39, %v38
    %s41 = scalar_lea.vmem %s0, 9
    %v42 = vld [vmem:[%s41] sm:$0x1]
    %43 = vrot.lane.b32.xlu0 %v42, 72
    %v44 = vpop.permute.xlu0 %43
    %vm45 = vcmask 654912
    %46 = vst.msk [vmem:[#allocation0] sm:$0x1] %vm45, %v44
    %s47 = scalar_lea.vmem %s0, 8
    %v48 = vld [vmem:[%s47] sm:$0x1]
    %49 = vrot.lane.b32.xlu0 %v48, 64
    %v50 = vpop.permute.xlu0 %49
    %vm51 = vcmask 589312
    %52 = vst.msk [vmem:[#allocation0] sm:$0x1] %vm51, %v50
    %s53 = scalar_lea.vmem %s0, 7
    %v54 = vld [vmem:[%s53] sm:$0x1]
    %55 = vrot.lane.b32.xlu0 %v54, 56
    %v56 = vpop.permute.xlu0 %55
    %vm57 = vcmask 523712
    %58 = vst.msk [vmem:[#allocation0] sm:$0x1] %vm57, %v56
    %s59 = scalar_lea.vmem %s0, 6
    %v60 = vld [vmem:[%s59] sm:$0x1]
    %61 = vrot.lane.b32.xlu0 %v60, 48
    %v62 = vpop.permute.xlu0 %61
    %vm63 = vcmask 458112
    %64 = vst.msk [vmem:[#allocation0] sm:$0x1] %vm63, %v62
    %s65 = scalar_lea.vmem %s0, 5
    %v66 = vld [vmem:[%s65] sm:$0x1]
    %67 = vrot.lane.b32.xlu0 %v66, 40
    %v68 = vpop.permute.xlu0 %67
    %vm69 = vcmask 392512
    %70 = vst.msk [vmem:[#allocation0] sm:$0x1] %vm69, %v68
    %s71 = scalar_lea.vmem %s0, 4
    %v72 = vld [vmem:[%s71] sm:$0x1]
    %73 = vrot.lane.b32.xlu0 %v72, 32
    %v74 = vpop.permute.xlu0 %73
    %vm75 = vcmask 326912
    %76 = vst.msk [vmem:[#allocation0] sm:$0x1] %vm75, %v74
    %s77 = scalar_lea.vmem %s0, 3
    %v78 = vld [vmem:[%s77] sm:$0x1]
    %79 = vrot.lane.b32.xlu0 %v78, 24
    %v80 = vpop.permute.xlu0 %79
    %vm81 = vcmask 261312
    %82 = vst.msk [vmem:[#allocation0] sm:$0x1] %vm81, %v80
    %s83 = scalar_lea.vmem %s0, 2
    %v84 = vld [vmem:[%s83] sm:$0x1]
    %85 = vrot.lane.b32.xlu0 %v84, 16
    %v86 = vpop.permute.xlu0 %85
    %vm87 = vcmask 195712
    %88 = vst.msk [vmem:[#allocation0] sm:$0x1] %vm87, %v86
    %s89 = scalar_lea.vmem %s0, 1
    %v90 = vld [vmem:[%s89] sm:$0x1]
    %91 = vrot.lane.b32.xlu0 %v90, 8
    %v92 = vpop.permute.xlu0 %91
    %vm93 = vcmask 130112
    %94 = vst.msk [vmem:[#allocation0] sm:$0x1] %vm93, %v92
    %s96 = sshllo.u32 0, 1
    %v98 = vld [vmem:[#allocation0] sm:%s96]
    %s99 = sshllo.u32 0, 1
    %100 = vst [vmem:[%s1] sm:%s99] %v98

// kernel: r_block_forward.1
$region0: #{r_block_forward.1}
  #allocation0 [shape = 'u32[]', space=smem, size = 0x4, offset = 0x4, fixed_abs, tag = 'smem constant byte address 0x4 - core index']
  #allocation1 [shape = 'u32[144,128]{1,0:T(1,128)}', space=vmem, size = 0x12000, scoped, tag = 'internal scratch']
  #allocation2 [shape = 'f32[18,144]{1,0:T(8,128)}', space=vmem, size = 0x6000, scoped, tag = 'scratch operand']
  %s0 = inlined_call_operand.vmem [shape: f32[2,18,72], index: 0, kind: input, shape index: {}]
  %s1 = inlined_call_operand.vmem [shape: f32[3,72,128], index: 1, kind: input, shape index: {}]
  %s2 = inlined_call_operand.vmem [shape: f32[1,128], index: 2, kind: input, shape index: {}]
  %s3 = inlined_call_operand.vmem [shape: f32[3,144,128], index: 3, kind: input, shape index: {}]
  %s4 = inlined_call_operand.vmem [shape: f32[1,128], index: 4, kind: input, shape index: {}]
  %s5 = inlined_call_operand.vmem [shape: f32[2,16,128], index: 5, kind: output, shape index: {}]
  %s6 = sld [smem:[#allocation0]]
  $region53: #{r_block_forward.1} parent=0
    _
  %s8 = ssub.s32 1, %s6
  %s9 = scalar_select 0, %s8, %s6
  loop: start=0, step=1, limit=4
  $region2: #{r_block_forward.1} parent=0 // loop_pre_header
    _
  $region3: #{r_block_forward.1} parent=0 // loop_header
    %s11 = sphi 0, %s15
    %p12 = scmp.ge.s32.totalorder %s11, 4
    %s21 = sphi 0, %s23
    %s24 = sphi 0, %s21
    %s25 = sphi 0, %s24
    %s41 = sphi 0, %s25
    %s45 = sphi 0, %s45
    %s47 = sphi 0, %s45
    %s48 = sphi 0, %s47
    %s62 = sphi 0, %s48
    %s66 = sphi 0, %s66
    %s68 = sphi 0, %s66
    %s69 = sphi 0, %s68
    %s83 = sphi 0, %s69
    %s87 = sphi 0, %s87
    %s89 = sphi 0, %s87
    %s90 = sphi 0, %s89
    %s104 = sphi 0, %s90
    %s108 = sphi 0, %s108
    %s110 = sphi 0, %s108
    %s111 = sphi 0, %s110
    %s125 = sphi 0, %s111
    %s131 = sphi 0, %s133
    %s134 = sphi 0, %s131
    %s135 = sphi 0, %s134
    %s151 = sphi 0, %s135
  $region4: #{r_block_forward.1} parent=0 // loop_header_branch
    %14 = sbr.rel (%p12) target = $region8
  $region5: #{r_block_forward.1} parent=0 // loop_body
    %s16 = ssub.s32 %s11, 1
    %s17 = ssub.s32 %s11, 2
    %s18 = sadd.s32 %s11, 1
    %s19 = ssub.s32 %s11, %s18
    %p20 = scmp.eq.s32.totalorder %s19, 0
    %s22 = sadd.s32 %s21, 1
    %s23 = scalar_select %p20, %s21, %s22
    %p26 = pneg %p20
    %p27 = scmp.eq.s32.totalorder %s11, 1
    %p28 = por %p26, %p27
    %p29 = scmp.ne.s32.totalorder %s21, %s24
    %p30 = scmp.eq.s32.totalorder %s11, 0
    %p31 = por %p29, %p30
    %p32 = scmp.ne.s32.totalorder %s21, %s24
    %p33 = scmp.eq.s32.totalorder %s16, 1
    %p34 = por %p32, %p33
    %p35 = scmp.ne.s32.totalorder %s24, %s25
    %p36 = scmp.eq.s32.totalorder %s16, 0
    %p37 = por %p35, %p36
    %p38 = scmp.ne.s32.totalorder %s24, %s25
    %p39 = scmp.eq.s32.totalorder %s17, 1
    %p40 = por %p38, %p39
    %p42 = scmp.ne.s32.totalorder %s25, %s41
    %p43 = scmp.eq.s32.totalorder %s17, 0
    %p44 = por %p42, %p43
    %s46 = sadd.s32 %s45, 1
    %p49 = scmp.eq.s32.totalorder %s11, 1
    %p50 = scmp.ne.s32.totalorder %s45, %s47
    %p51 = scmp.eq.s32.totalorder %s11, 0
    %p52 = por %p50, %p51
    %p53 = scmp.ne.s32.totalorder %s45, %s47
    %p54 = scmp.eq.s32.totalorder %s16, 1
    %p55 = por %p53, %p54
    %p56 = scmp.ne.s32.totalorder %s47, %s48
    %p57 = scmp.eq.s32.totalorder %s16, 0
    %p58 = por %p56, %p57
    %p59 = scmp.ne.s32.totalorder %s47, %s48
    %p60 = scmp.eq.s32.totalorder %s17, 1
    %p61 = por %p59, %p60
    %p63 = scmp.ne.s32.totalorder %s48, %s62
    %p64 = scmp.eq.s32.totalorder %s17, 0
    %p65 = por %p63, %p64
    %s67 = sadd.s32 %s66, 1
    %p70 = scmp.eq.s32.totalorder %s11, 1
    %p71 = scmp.ne.s32.totalorder %s66, %s68
    %p72 = scmp.eq.s32.totalorder %s11, 0
    %p73 = por %p71, %p72
    %p74 = scmp.ne.s32.totalorder %s66, %s68
    %p75 = scmp.eq.s32.totalorder %s16, 1
    %p76 = por %p74, %p75
    %p77 = scmp.ne.s32.totalorder %s68, %s69
    %p78 = scmp.eq.s32.totalorder %s16, 0
    %p79 = por %p77, %p78
    %p80 = scmp.ne.s32.totalorder %s68, %s69
    %p81 = scmp.eq.s32.totalorder %s17, 1
    %p82 = por %p80, %p81
    %p84 = scmp.ne.s32.totalorder %s69, %s83
    %p85 = scmp.eq.s32.totalorder %s17, 0
    %p86 = por %p84, %p85
    %s88 = sadd.s32 %s87, 1
    %p91 = scmp.eq.s32.totalorder %s11, 1
    %p92 = scmp.ne.s32.totalorder %s87, %s89
    %p93 = scmp.eq.s32.totalorder %s11, 0
    %p94 = por %p92, %p93
    %p95 = scmp.ne.s32.totalorder %s87, %s89
    %p96 = scmp.eq.s32.totalorder %s16, 1
    %p97 = por %p95, %p96
    %p98 = scmp.ne.s32.totalorder %s89, %s90
    %p99 = scmp.eq.s32.totalorder %s16, 0
    %p100 = por %p98, %p99
    %p101 = scmp.ne.s32.totalorder %s89, %s90
    %p102 = scmp.eq.s32.totalorder %s17, 1
    %p103 = por %p101, %p102
    %p105 = scmp.ne.s32.totalorder %s90, %s104
    %p106 = scmp.eq.s32.totalorder %s17, 0
    %p107 = por %p105, %p106
    %s109 = sadd.s32 %s108, 1
    %p112 = scmp.eq.s32.totalorder %s11, 1
    %p113 = scmp.ne.s32.totalorder %s108, %s110
    %p114 = scmp.eq.s32.totalorder %s11, 0
    %p115 = por %p113, %p114
    %p116 = scmp.ne.s32.totalorder %s108, %s110
    %p117 = scmp.eq.s32.totalorder %s16, 1
    %p118 = por %p116, %p117
    %p119 = scmp.ne.s32.totalorder %s110, %s111
    %p120 = scmp.eq.s32.totalorder %s16, 0
    %p121 = por %p119, %p120
    %p122 = scmp.ne.s32.totalorder %s110, %s111
    %p123 = scmp.eq.s32.totalorder %s17, 1
    %p124 = por %p122, %p123
    %p126 = scmp.ne.s32.totalorder %s111, %s125
    %p127 = scmp.eq.s32.totalorder %s17, 0
    %p128 = por %p126, %p127
    %s129 = ssub.s32 %s11, %s18
    %p130 = scmp.eq.s32.totalorder %s129, 0
    %s132 = sadd.s32 %s131, 1
    %s133 = scalar_select %p130, %s131, %s132
    %p136 = pneg %p130
    %p137 = scmp.eq.s32.totalorder %s11, 1
    %p138 = por %p136, %p137
    %p139 = scmp.ne.s32.totalorder %s131, %s134
    %p140 = scmp.eq.s32.totalorder %s11, 0
    %p141 = por %p139, %p140
    %p142 = scmp.ne.s32.totalorder %s131, %s134
    %p143 = scmp.eq.s32.totalorder %s16, 1
    %p144 = por %p142, %p143
    %p145 = scmp.ne.s32.totalorder %s134, %s135
    %p146 = scmp.eq.s32.totalorder %s16, 0
    %p147 = por %p145, %p146
    %p148 = scmp.ne.s32.totalorder %s134, %s135
    %p149 = scmp.eq.s32.totalorder %s17, 1
    %p150 = por %p148, %p149
    %p152 = scmp.ne.s32.totalorder %s135, %s151
    %p153 = scmp.eq.s32.totalorder %s17, 0
    %p154 = por %p152, %p153
    %p155 = scmp.le.s32.totalorder 1, %s11
    %p156 = scmp.lt.s32.totalorder %s11, 3
    %p157 = pnand %p155, %p156
    %p158 = pneg %p157
    // Predicated region
    $region9: #{r_block_forward.1} parent=5 // pred_check
      _
    $region10: #{r_block_forward.1} parent=5 // pred_check_branch
      %160 = sbr.rel (%p157) target = $region12
    $region11: #{r_block_forward.1} parent=5 // pred_region
      %s161 = ssub.s32 %s11, 1
      // Predicated region
      $region13: #{r_block_forward.1} parent=11 // pred_check
        %p162 = pneg %p58
      $region14: #{r_block_forward.1} parent=11 // pred_check_branch
        %164 = sbr.rel (%p162) target = $region16
      $region15: #{r_block_forward.1} parent=11 // pred_region
        _
      $region16: #{r_block_forward.1} parent=11 // pred_fallthru
        _
      // Predicated region
      $region17: #{r_block_forward.1} parent=11 // pred_check
        %p165 = pneg %p79
      $region18: #{r_block_forward.1} parent=11 // pred_check_branch
        %167 = sbr.rel (%p165) target = $region20
      $region19: #{r_block_forward.1} parent=11 // pred_region
        _
      $region20: #{r_block_forward.1} parent=11 // pred_fallthru
        _
      // Predicated region
      $region21: #{r_block_forward.1} parent=11 // pred_check
        %p168 = pneg %p100
      $region22: #{r_block_forward.1} parent=11 // pred_check_branch
        %170 = sbr.rel (%p168) target = $region24
      $region23: #{r_block_forward.1} parent=11 // pred_region
        _
      $region24: #{r_block_forward.1} parent=11 // pred_fallthru
        _
      // Predicated region
      $region25: #{r_block_forward.1} parent=11 // pred_check
        %p171 = pneg %p121
      $region26: #{r_block_forward.1} parent=11 // pred_check_branch
        %173 = sbr.rel (%p171) target = $region28
      $region27: #{r_block_forward.1} parent=11 // pred_region
        _
      $region28: #{r_block_forward.1} parent=11 // pred_fallthru
        _
    $region12: #{r_block_forward.1} parent=5 // pred_fallthru
      _
    %p174 = scmp.lt.s32.totalorder %s11, 2
    // Predicated region
    $region29: #{r_block_forward.1} parent=5 // pred_check
      %p175 = pneg %p174
    $region30: #{r_block_forward.1} parent=5 // pred_check_branch
      %177 = sbr.rel (%p175) target = $region32
    $region31: #{r_block_forward.1} parent=5 // pred_region
      // Predicated region
      $region33: #{r_block_forward.1} parent=31 // pred_check
        %p178 = pneg %p31
      $region34: #{r_block_forward.1} parent=31 // pred_check_branch
        %180 = sbr.rel (%p178) target = $region36
      $region35: #{r_block_forward.1} parent=31 // pred_region
        %p181 = scmp.lt.s32.totalorder %s11, 1
        %s182 = scalar_select %p181, %s11, 1
        %s183 = smul.addr %s182, 3
        %s184 = smul.addr %s183, 8
        %s185 = scalar_lea.vmem %s0, %s184
      $region36: #{r_block_forward.1} parent=31 // pred_fallthru
        _
    $region32: #{r_block_forward.1} parent=5 // pred_fallthru
      _
    %p186 = scmp.le.s32.totalorder 1, %s11
    %p187 = scmp.lt.s32.totalorder %s11, 3
    %p188 = pnand %p186, %p187
    %p189 = pneg %p188
    // Predicated region
    $region37: #{r_block_forward.1} parent=5 // pred_check
      _
    $region38: #{r_block_forward.1} parent=5 // pred_check_branch
      %191 = sbr.rel (%p188) target = $region40
    $region39: #{r_block_forward.1} parent=5 // pred_region
      %s192 = ssub.s32 %s11, 1
      %p193 = scmp.lt.s32.totalorder %s16, 1
      %s194 = scalar_select %p193, %s16, 1
      %s195 = smul.addr %s194, 3
      %s196 = smul.addr %s195, 8
      %s197 = scalar_lea.vmem %s0, %s196
      %p198 = pneg %p37
      %p199 = pneg %p34
      %p200 = pneg %p58
      %p201 = pneg %p55
      %p202 = pneg %p79
      %p203 = pneg %p76
      %p204 = pneg %p100
      %p205 = pneg %p97
      %p206 = pneg %p121
      %p207 = pneg %p118
      %p208 = pneg %p147
      %p209 = pneg %p144
      %p210 = scmp.lt.s32.totalorder %s16, 1
      %s211 = scalar_select %p210, %s16, 1
      %s212 = smul.addr %s211, 2
      %s213 = smul.addr %s212, 8
      %s214 = scalar_lea.vmem %s5, %s213
      %p215 = scmp.lt.s32.totalorder %s16, 1
      %s216 = scalar_select %p215, %s16, 1
      %s217 = smul.addr %s216, 3
      %s218 = smul.addr %s217, 8
      %s219 = scalar_lea.vmem %s0, %s218
      %p220 = scmp.lt.s32.totalorder %s16, 1
      %s221 = scalar_select %p220, %s16, 1
      %s222 = smul.addr %s221, 2
      %s223 = smul.addr %s222, 8
      %s224 = scalar_lea.vmem %s5, %s223
      %v225 = vld [vmem:[%s219] sm:$0xff]
      %v226 = vld [vmem:[%s219 + $0x8] sm:$0xff]
      %v227 = vld [vmem:[%s219 + $0x10] sm:$0x3]
      %v228 = vld [vmem:[%s2] sm:$0x1]
      %v229 = vld [vmem:[%s1] sm:$0xff]
      %v230 = vld [vmem:[%s1 + $0x8] sm:$0xff]
      %v231 = vld [vmem:[%s1 + $0x10] sm:$0xff]
      %v232 = vld [vmem:[%s1 + $0x18] sm:$0xff]
      %v233 = vld [vmem:[%s1 + $0x20] sm:$0xff]
      %v234 = vld [vmem:[%s1 + $0x28] sm:$0xff]
      %v235 = vld [vmem:[%s1 + $0x30] sm:$0xff]
      %v236 = vld [vmem:[%s1 + $0x38] sm:$0xff]
      %v237 = vld [vmem:[%s1 + $0x40] sm:$0xff]
      %s238 = scalar_lea.vmem %s1, 72
      %v239 = vld [vmem:[%s238] sm:$0xff]
      %v240 = vld [vmem:[%s238 + $0x8] sm:$0xff]
      %v241 = vld [vmem:[%s238 + $0x10] sm:$0xff]
      %v242 = vld [vmem:[%s238 + $0x18] sm:$0xff]
      %v243 = vld [vmem:[%s238 + $0x20] sm:$0xff]
      %v244 = vld [vmem:[%s238 + $0x28] sm:$0xff]
      %v245 = vld [vmem:[%s238 + $0x30] sm:$0xff]
      %v246 = vld [vmem:[%s238 + $0x38] sm:$0xff]
      %v247 = vld [vmem:[%s238 + $0x40] sm:$0xff]
      %vm251 = vcmask 1046528
      %v252 = vrot.slane %v225, 1
      %v253 = vrot.slane %v226, 1
      %v254 = vsel %vm251, %v252, %v253
      %v255 = vrot.slane %v227, 1
      %v256 = vsel %vm251, %v253, %v255
      %vm257 = vcmask 588800
      %v258 = vsel %vm257, %v254, 0
      %v260 = vsel %vm257, %v256, 0
      %262 = vmatprep.subr.mxu0 0.0
      %263 = vmatpush1.msra.mxu0 %v239
      %264 = vmatprep.subr.mxu0 0.0
      %265 = vmatpush1.msra.mxu0 %v240
      %266 = vmatprep.subr.mxu0 0.0
      %267 = vmatpush1.msra.mxu0 %v241
      %268 = vmatprep.subr.mxu0 0.0
      %269 = vmatpush1.msra.mxu0 %v242
      %270 = vmatprep.subr.mxu0 0.0
      %271 = vmatpush1.msra.mxu0 %v243
      %272 = vmatprep.subr.mxu0 0.0
      %273 = vmatpush1.msra.mxu0 %v244
      %274 = vmatprep.subr.mxu0 0.0
      %275 = vmatpush1.msra.mxu0 %v245
      %276 = vmatprep.subr.mxu0 0.0
      %277 = vmatpush1.msra.mxu0 %v246
      %278 = vmatprep.subr.mxu0 0.0
      %279 = vmatpush1.msra.mxu0 %v247
      %280 = vmatprep.subr.mxu0 0.0
      %281 = vmatpush1.msra.mxu0 0.0
      %282 = vmatprep.subr.mxu0 0.0
      %283 = vmatpush1.msra.mxu0 0.0
      %284 = vmatprep.subr.mxu0 0.0
      %285 = vmatpush1.msra.mxu0 0.0
      %286 = vmatprep.subr.mxu0 0.0
      %287 = vmatpush1.msra.mxu0 0.0
      %288 = vmatprep.subr.mxu0 0.0
      %289 = vmatpush1.msra.mxu0 0.0
      %290 = vmatprep.subr.mxu0 0.0
      %291 = vmatpush1.msra.mxu0 0.0
      %292 = vmatprep.subr.mxu0 0.0
      %293 = vmatpush1.msra.mxu0 0.0
      %294 = vmatprep.subr.mxu0 0.0
      %295 = vmatpush1.msra.mxu0 0.0
      %296 = vmatprep.subr.mxu0 0.0
      %297 = vmatpush1.msra.mxu0 0.0
      %298 = vmatprep.subr.mxu0 0.0
      %299 = vmatpush1.msra.mxu0 0.0
      %300 = vmatprep.subr.mxu0 0.0
      %301 = vmatpush1.msra.mxu0 0.0
      %302 = vmatprep.subr.mxu0 0.0
      %303 = vmatpush1.msra.mxu0 0.0
      %304 = vmatprep.subr.mxu0 0.0
      %305 = vmatpush1.msra.mxu0 0.0
      %306 = vmatprep.subr.mxu0 0.0
      %307 = vmatpush1.msra.mxu0 0.0
      %308 = vmatprep.subr.mxu0 0.0
      %309 = vmatpush1.msra.mxu0 0.0
      %310 = vmatprep.subr.mxu0 0.0
      %311 = vmatpush1.msra.mxu0 0.0
      %312 = vmatprep.subr.mxu0 0.0
      %313 = vmatpush1.msra.mxu0 0.0
      %314 = vmatprep.subr.mxu0 0.0
      %315 = vmatpush1.msra.mxu0 0.0
      %316 = vmatprep.subr.mxu0 0.0
      %317 = vmatpush1.msra.mxu0 0.0
      %318 = vmatprep.subr.mxu0 0.0
      %319 = vmatpush1.msra.mxu0 0.0
      %320 = vmatprep.subr.mxu0 0.0
      %321 = vmatpush1.msra.mxu0 0.0
      %322 = vmatprep.subr.mxu0 0.0
      %323 = vmatpush1.msra.mxu0 0.0
      %324 = vmatprep.subr.mxu0 0.0
      %325 = vmatpush1.msra.mxu0 0.0
      %326 = vmatprep.mubr.f32.mxu0 0.0
      %327 = vmatmul.mubr.f32.gmra.mrb[0].mxu0 %v258
      %v328 = vpop.f32.mrb[0].mxu0
      %v329 = vadd.f32 0.0, %v328
      %v330 = vpop.f32.mrb[0].mxu0
      %331 = vmatprep.mubr.f32.mxu0 0.0
      %332 = vmatmul.mubr.f32.gmra.mrb[0].mxu0 %v260
      %v333 = vpop.f32.mrb[0].mxu0
      %v334 = vadd.f32 0.0, %v333
      %v335 = vpop.f32.mrb[0].mxu0
      %336 = vdwg.mxu0
      %v337 = vsel %vm257, %v225, 0
      %v339 = vsel %vm257, %v226, 0
      %341 = vmatprep.subr.mxu0 0.0
      %342 = vmatpush1.msra.mxu0 %v229
      %343 = vmatprep.subr.mxu0 0.0
      %344 = vmatpush1.msra.mxu0 %v230
      %345 = vmatprep.subr.mxu0 0.0
      %346 = vmatpush1.msra.mxu0 %v231
      %347 = vmatprep.subr.mxu0 0.0
      %348 = vmatpush1.msra.mxu0 %v232
      %349 = vmatprep.subr.mxu0 0.0
      %350 = vmatpush1.msra.mxu0 %v233
      %351 = vmatprep.subr.mxu0 0.0
      %352 = vmatpush1.msra.mxu0 %v234
      %353 = vmatprep.subr.mxu0 0.0
      %354 = vmatpush1.msra.mxu0 %v235
      %355 = vmatprep.subr.mxu0 0.0
      %356 = vmatpush1.msra.mxu0 %v236
      %357 = vmatprep.subr.mxu0 0.0
      %358 = vmatpush1.msra.mxu0 %v237
      %359 = vmatprep.subr.mxu0 0.0
      %360 = vmatpush1.msra.mxu0 0.0
      %361 = vmatprep.subr.mxu0 0.0
      %362 = vmatpush1.msra.mxu0 0.0
      %363 = vmatprep.subr.mxu0 0.0
      %364 = vmatpush1.msra.mxu0 0.0
      %365 = vmatprep.subr.mxu0 0.0
      %366 = vmatpush1.msra.mxu0 0.0
      %367 = vmatprep.subr.mxu0 0.0
      %368 = vmatpush1.msra.mxu0 0.0
      %369 = vmatprep.subr.mxu0 0.0
      %370 = vmatpush1.msra.mxu0 0.0
      %371 = vmatprep.subr.mxu0 0.0
      %372 = vmatpush1.msra.mxu0 0.0
      %373 = vmatprep.subr.mxu0 0.0
      %374 = vmatpush1.msra.mxu0 0.0
      %375 = vmatprep.subr.mxu0 0.0
      %376 = vmatpush1.msra.mxu0 0.0
      %377 = vmatprep.subr.mxu0 0.0
      %378 = vmatpush1.msra.mxu0 0.0
      %379 = vmatprep.subr.mxu0 0.0
      %380 = vmatpush1.msra.mxu0 0.0
      %381 = vmatprep.subr.mxu0 0.0
      %382 = vmatpush1.msra.mxu0 0.0
      %383 = vmatprep.subr.mxu0 0.0
      %384 = vmatpush1.msra.mxu0 0.0
      %385 = vmatprep.subr.mxu0 0.0
      %386 = vmatpush1.msra.mxu0 0.0
      %387 = vmatprep.subr.mxu0 0.0
      %388 = vmatpush1.msra.mxu0 0.0
      %389 = vmatprep.subr.mxu0 0.0
      %390 = vmatpush1.msra.mxu0 0.0
      %391 = vmatprep.subr.mxu0 0.0
      %392 = vmatpush1.msra.mxu0 0.0
      %393 = vmatprep.subr.mxu0 0.0
      %394 = vmatpush1.msra.mxu0 0.0
      %395 = vmatprep.subr.mxu0 0.0
      %396 = vmatpush1.msra.mxu0 0.0
      %397 = vmatprep.subr.mxu0 0.0
      %398 = vmatpush1.msra.mxu0 0.0
      %399 = vmatprep.subr.mxu0 0.0
      %400 = vmatpush1.msra.mxu0 0.0
      %401 = vmatprep.subr.mxu0 0.0
      %402 = vmatpush1.msra.mxu0 0.0
      %403 = vmatprep.subr.mxu0 0.0
      %404 = vmatpush1.msra.mxu0 0.0
      %405 = vmatprep.mubr.f32.mxu0 0.0
      %406 = vmatmul.mubr.f32.gmra.mrb[0].mxu0 %v337
      %v407 = vpop.f32.mrb[0].mxu0
      %v408 = vadd.f32 %v329, %v407
      %v409 = vpop.f32.mrb[0].mxu0
      %410 = vmatprep.mubr.f32.mxu0 0.0
      %411 = vmatmul.mubr.f32.gmra.mrb[0].mxu0 %v339
      %v412 = vpop.f32.mrb[0].mxu0
      %v413 = vadd.f32 %v334, %v412
      %v414 = vpop.f32.mrb[0].mxu0
      %415 = vdwg.mxu0
      %s416 = scalar_lea.vmem %s1, 144
      %v417 = vld [vmem:[%s416] sm:$0xff]
      %v418 = vld [vmem:[%s416 + $0x8] sm:$0xff]
      %v419 = vld [vmem:[%s416 + $0x10] sm:$0xff]
      %v420 = vld [vmem:[%s416 + $0x18] sm:$0xff]
      %v421 = vld [vmem:[%s416 + $0x20] sm:$0xff]
      %v422 = vld [vmem:[%s416 + $0x28] sm:$0xff]
      %v423 = vld [vmem:[%s416 + $0x30] sm:$0xff]
      %v424 = vld [vmem:[%s416 + $0x38] sm:$0xff]
      %v425 = vld [vmem:[%s416 + $0x40] sm:$0xff]
      %vm426 = vcmask 1045504
      %v427 = vrot.slane %v225, 2
      %v428 = vrot.slane %v226, 2
      %v429 = vsel %vm426, %v427, %v428
      %v430 = vrot.slane %v227, 2
      %v431 = vsel %vm426, %v428, %v430
      %v432 = vsel %vm257, %v429, 0
      %v434 = vsel %vm257, %v431, 0
      %436 = vmatprep.subr.mxu0 0.0
      %437 = vmatpush1.msra.mxu0 %v417
      %438 = vmatprep.subr.mxu0 0.0
      %439 = vmatpush1.msra.mxu0 %v418
      %440 = vmatprep.subr.mxu0 0.0
      %441 = vmatpush1.msra.mxu0 %v419
      %442 = vmatprep.subr.mxu0 0.0
      %443 = vmatpush1.msra.mxu0 %v420
      %444 = vmatprep.subr.mxu0 0.0
      %445 = vmatpush1.msra.mxu0 %v421
      %446 = vmatprep.subr.mxu0 0.0
      %447 = vmatpush1.msra.mxu0 %v422
      %448 = vmatprep.subr.mxu0 0.0
      %449 = vmatpush1.msra.mxu0 %v423
      %450 = vmatprep.subr.mxu0 0.0
      %451 = vmatpush1.msra.mxu0 %v424
      %452 = vmatprep.subr.mxu0 0.0
      %453 = vmatpush1.msra.mxu0 %v425
      %454 = vmatprep.subr.mxu0 0.0
      %455 = vmatpush1.msra.mxu0 0.0
      %456 = vmatprep.subr.mxu0 0.0
      %457 = vmatpush1.msra.mxu0 0.0
      %458 = vmatprep.subr.mxu0 0.0
      %459 = vmatpush1.msra.mxu0 0.0
      %460 = vmatprep.subr.mxu0 0.0
      %461 = vmatpush1.msra.mxu0 0.0
      %462 = vmatprep.subr.mxu0 0.0
      %463 = vmatpush1.msra.mxu0 0.0
      %464 = vmatprep.subr.mxu0 0.0
      %465 = vmatpush1.msra.mxu0 0.0
      %466 = vmatprep.subr.mxu0 0.0
      %467 = vmatpush1.msra.mxu0 0.0
      %468 = vmatprep.subr.mxu0 0.0
      %469 = vmatpush1.msra.mxu0 0.0
      %470 = vmatprep.subr.mxu0 0.0
      %471 = vmatpush1.msra.mxu0 0.0
      %472 = vmatprep.subr.mxu0 0.0
      %473 = vmatpush1.msra.mxu0 0.0
      %474 = vmatprep.subr.mxu0 0.0
      %475 = vmatpush1.msra.mxu0 0.0
      %476 = vmatprep.subr.mxu0 0.0
      %477 = vmatpush1.msra.mxu0 0.0
      %478 = vmatprep.subr.mxu0 0.0
      %479 = vmatpush1.msra.mxu0 0.0
      %480 = vmatprep.subr.mxu0 0.0
      %481 = vmatpush1.msra.mxu0 0.0
      %482 = vmatprep.subr.mxu0 0.0
      %483 = vmatpush1.msra.mxu0 0.0
      %484 = vmatprep.subr.mxu0 0.0
      %485 = vmatpush1.msra.mxu0 0.0
      %486 = vmatprep.subr.mxu0 0.0
      %487 = vmatpush1.msra.mxu0 0.0
      %488 = vmatprep.subr.mxu0 0.0
      %489 = vmatpush1.msra.mxu0 0.0
      %490 = vmatprep.subr.mxu0 0.0
      %491 = vmatpush1.msra.mxu0 0.0
      %492 = vmatprep.subr.mxu0 0.0
      %493 = vmatpush1.msra.mxu0 0.0
      %494 = vmatprep.subr.mxu0 0.0
      %495 = vmatpush1.msra.mxu0 0.0
      %496 = vmatprep.subr.mxu0 0.0
      %497 = vmatpush1.msra.mxu0 0.0
      %498 = vmatprep.subr.mxu0 0.0
      %499 = vmatpush1.msra.mxu0 0.0
      %500 = vmatprep.mubr.f32.mxu0 0.0
      %501 = vmatmul.mubr.f32.gmra.mrb[0].mxu0 %v432
      %v502 = vpop.f32.mrb[0].mxu0
      %v503 = vadd.f32 0.0, %v502
      %v504 = vpop.f32.mrb[0].mxu0
      %505 = vmatprep.mubr.f32.mxu0 0.0
      %506 = vmatmul.mubr.f32.gmra.mrb[0].mxu0 %v434
      %v507 = vpop.f32.mrb[0].mxu0
      %v508 = vadd.f32 0.0, %v507
      %v509 = vpop.f32.mrb[0].mxu0
      %510 = vdwg.mxu0
      %v511 = vadd.f32 %v408, %v503
      %v512 = vadd.f32 %v413, %v508
      %v514 = vlaneseq
      %v515 = vshrl.u32 %v514, 7
      %v516 = vsub.s32 0, %v515
      %v517 = vrot.slane %v228, %v516
      %v519 = vadd.f32 %v511, %v517
      %v520 = vadd.f32 %v512, %v517
      %v521 = vmax.f32 %v519, 0.0
      %v522 = vmax.f32 %v520, 0.0
      %523 = vst [vmem:[#allocation2] sm:$0xff] 0.0
      %vm524 = vcmask 130048
      %525 = vst.msk [vmem:[#allocation2 + $0x8] sm:$0xff] %vm524, 0.0
      %526 = vst [vmem:[#allocation2 + $0x10] sm:$0xff] 0.0
      %527 = vst.msk [vmem:[#allocation2 + $0x18] sm:$0xff] %vm524, 0.0
      %528 = vst [vmem:[#allocation2 + $0x20] sm:$0x3] 0.0
      %vm529 = vcmask 123904
      %530 = vst.msk [vmem:[#allocation2 + $0x28] sm:$0x3] %vm529, 0.0
      %vm533 = vcmask 1040384
      %v534 = vrot.slane %v521, 7
      %v535 = vrot.slane %v522, 7
      %v536 = vsel %vm533, %v534, %v535
      %537 = vrot.lane.b32.xlu0 %v534, 8
      %v538 = vpop.permute.xlu0 %537
      %539 = vrot.lane.b32.xlu0 %v536, 8
      %v540 = vpop.permute.xlu0 %539
      %541 = vrot.lane.b32.xlu0 %v535, 8
      %v542 = vpop.permute.xlu0 %541
      %vm546 = vcmask 1047617
      %547 = vst.msk [vmem:[#allocation2] sm:$0xfe] %vm546, %v538
      %vm548 = vcmask 64513
      %549 = vst.msk [vmem:[#allocation2 + $0x8] sm:$0xfe] %vm548, %v538
      %vm550 = vcmask 1047616
      %551 = vst.msk [vmem:[#allocation2 + $0x10] sm:$0xff] %vm550, %v540
      %vm552 = vcmask 64512
      %553 = vst.msk [vmem:[#allocation2 + $0x18] sm:$0xff] %vm552, %v540
      %vm554 = vcmask 1040448
      %555 = vst.msk [vmem:[#allocation2 + $0x20] sm:$0x1] %vm554, %v542
      %vm556 = vcmask 57344
      %557 = vst.msk [vmem:[#allocation2 + $0x28] sm:$0x1] %vm556, %v542
      %v558 = vld [vmem:[#allocation2] sm:$0xff]
      %v559 = vld [vmem:[#allocation2 + $0x8] sm:$0xff]
      %v560 = vld [vmem:[#allocation2 + $0x10] sm:$0xff]
      %v561 = vld [vmem:[#allocation2 + $0x18] sm:$0xff]
      %v562 = vld [vmem:[#allocation2 + $0x20] sm:$0x3]
      %v563 = vld [vmem:[#allocation2 + $0x28] sm:$0x3]
      %v564 = vld [vmem:[%s4] sm:$0x1]
      %v565 = vld [vmem:[%s3] sm:$0xff]
      %v566 = vld [vmem:[%s3 + $0x8] sm:$0xff]
      %v567 = vld [vmem:[%s3 + $0x10] sm:$0xff]
      %v568 = vld [vmem:[%s3 + $0x18] sm:$0xff]
      %v569 = vld [vmem:[%s3 + $0x20] sm:$0xff]
      %v570 = vld [vmem:[%s3 + $0x28] sm:$0xff]
      %v571 = vld [vmem:[%s3 + $0x30] sm:$0xff]
      %v572 = vld [vmem:[%s3 + $0x38] sm:$0xff]
      %v573 = vld [vmem:[%s3 + $0x40] sm:$0xff]
      %v574 = vld [vmem:[%s3 + $0x48] sm:$0xff]
      %v575 = vld [vmem:[%s3 + $0x50] sm:$0xff]
      %v576 = vld [vmem:[%s3 + $0x58] sm:$0xff]
      %v577 = vld [vmem:[%s3 + $0x60] sm:$0xff]
      %v578 = vld [vmem:[%s3 + $0x68] sm:$0xff]
      %v579 = vld [vmem:[%s3 + $0x70] sm:$0xff]
      %v580 = vld [vmem:[%s3 + $0x78] sm:$0xff]
      %v581 = vld [vmem:[%s3 + $0x80] sm:$0xff]
      %v582 = vld [vmem:[%s3 + $0x88] sm:$0xff]
      %s583 = scalar_lea.vmem %s3, 144
      %v584 = vld [vmem:[%s583] sm:$0xff]
      %v585 = vld [vmem:[%s583 + $0x8] sm:$0xff]
      %v586 = vld [vmem:[%s583 + $0x10] sm:$0xff]
      %v587 = vld [vmem:[%s583 + $0x18] sm:$0xff]
      %v588 = vld [vmem:[%s583 + $0x20] sm:$0xff]
      %v589 = vld [vmem:[%s583 + $0x28] sm:$0xff]
      %v590 = vld [vmem:[%s583 + $0x30] sm:$0xff]
      %v591 = vld [vmem:[%s583 + $0x38] sm:$0xff]
      %v592 = vld [vmem:[%s583 + $0x40] sm:$0xff]
      %v593 = vld [vmem:[%s583 + $0x48] sm:$0xff]
      %v594 = vld [vmem:[%s583 + $0x50] sm:$0xff]
      %v595 = vld [vmem:[%s583 + $0x58] sm:$0xff]
      %v596 = vld [vmem:[%s583 + $0x60] sm:$0xff]
      %v597 = vld [vmem:[%s583 + $0x68] sm:$0xff]
      %v598 = vld [vmem:[%s583 + $0x70] sm:$0xff]
      %v599 = vld [vmem:[%s583 + $0x78] sm:$0xff]
      %v600 = vld [vmem:[%s583 + $0x80] sm:$0xff]
      %v601 = vld [vmem:[%s583 + $0x88] sm:$0xff]
      %v608 = vrot.slane %v558, 1
      %v609 = vrot.slane %v560, 1
      %v610 = vsel %vm251, %v608, %v609
      %v611 = vrot.slane %v559, 1
      %v612 = vrot.slane %v561, 1
      %v613 = vsel %vm251, %v611, %v612
      %v614 = vrot.slane %v562, 1
      %v615 = vsel %vm251, %v609, %v614
      %v616 = vrot.slane %v563, 1
      %v617 = vsel %vm251, %v612, %v616
      %v620 = vsel %vm524, %v613, 0
      %v622 = vsel %vm524, %v617, 0
      %624 = vmatprep.subr.mxu0 0.0
      %625 = vmatpush1.msra.mxu0 %v584
      %626 = vmatprep.subr.mxu0 0.0
      %627 = vmatpush1.msra.mxu0 %v585
      %628 = vmatprep.subr.mxu0 0.0
      %629 = vmatpush1.msra.mxu0 %v586
      %630 = vmatprep.subr.mxu0 0.0
      %631 = vmatpush1.msra.mxu0 %v587
      %632 = vmatprep.subr.mxu0 0.0
      %633 = vmatpush1.msra.mxu0 %v588
      %634 = vmatprep.subr.mxu0 0.0
      %635 = vmatpush1.msra.mxu0 %v589
      %636 = vmatprep.subr.mxu0 0.0
      %637 = vmatpush1.msra.mxu0 %v590
      %638 = vmatprep.subr.mxu0 0.0
      %639 = vmatpush1.msra.mxu0 %v591
      %640 = vmatprep.subr.mxu0 0.0
      %641 = vmatpush1.msra.mxu0 %v592
      %642 = vmatprep.subr.mxu0 0.0
      %643 = vmatpush1.msra.mxu0 %v593
      %644 = vmatprep.subr.mxu0 0.0
      %645 = vmatpush1.msra.mxu0 %v594
      %646 = vmatprep.subr.mxu0 0.0
      %647 = vmatpush1.msra.mxu0 %v595
      %648 = vmatprep.subr.mxu0 0.0
      %649 = vmatpush1.msra.mxu0 %v596
      %650 = vmatprep.subr.mxu0 0.0
      %651 = vmatpush1.msra.mxu0 %v597
      %652 = vmatprep.subr.mxu0 0.0
      %653 = vmatpush1.msra.mxu0 %v598
      %654 = vmatprep.subr.mxu0 0.0
      %655 = vmatpush1.msra.mxu0 %v599
      %656 = vmatprep.subr.mxu0 0.0
      %657 = vmatpush1.msra.mxu0 %v600
      %658 = vmatprep.subr.mxu0 0.0
      %659 = vmatpush1.msra.mxu0 %v601
      %660 = vmatprep.subr.mxu0 0.0
      %661 = vmatpush1.msra.mxu0 0.0
      %662 = vmatprep.subr.mxu0 0.0
      %663 = vmatpush1.msra.mxu0 0.0
      %664 = vmatprep.subr.mxu0 0.0
      %665 = vmatpush1.msra.mxu0 0.0
      %666 = vmatprep.subr.mxu0 0.0
      %667 = vmatpush1.msra.mxu0 0.0
      %668 = vmatprep.subr.mxu0 0.0
      %669 = vmatpush1.msra.mxu0 0.0
      %670 = vmatprep.subr.mxu0 0.0
      %671 = vmatpush1.msra.mxu0 0.0
      %672 = vmatprep.subr.mxu0 0.0
      %673 = vmatpush1.msra.mxu0 0.0
      %674 = vmatprep.subr.mxu0 0.0
      %675 = vmatpush1.msra.mxu0 0.0
      %676 = vmatprep.subr.mxu0 0.0
      %677 = vmatpush1.msra.mxu0 0.0
      %678 = vmatprep.subr.mxu0 0.0
      %679 = vmatpush1.msra.mxu0 0.0
      %680 = vmatprep.subr.mxu0 0.0
      %681 = vmatpush1.msra.mxu0 0.0
      %682 = vmatprep.subr.mxu0 0.0
      %683 = vmatpush1.msra.mxu0 0.0
      %684 = vmatprep.subr.mxu0 0.0
      %685 = vmatpush1.msra.mxu0 0.0
      %686 = vmatprep.subr.mxu0 0.0
      %687 = vmatpush1.msra.mxu0 0.0
      %688 = vmatprep.mubr.f32.mxu0 %v620
      %689 = vmatmul.mubr.f32.gmra.mrb[0].mxu0 %v610
      %v690 = vpop.f32.mrb[0].mxu0
      %v691 = vadd.f32 0.0, %v690
      %v692 = vpop.f32.mrb[0].mxu0
      %693 = vmatprep.mubr.f32.mxu0 %v622
      %694 = vmatmul.mubr.f32.gmra.mrb[0].mxu0 %v615
      %v695 = vpop.f32.mrb[0].mxu0
      %v696 = vadd.f32 0.0, %v695
      %v697 = vpop.f32.mrb[0].mxu0
      %698 = vdwg.mxu0
      %v699 = vsel %vm524, %v559, 0
      %v701 = vsel %vm524, %v561, 0
      %703 = vmatprep.subr.mxu0 0.0
      %704 = vmatpush1.msra.mxu0 %v565
      %705 = vmatprep.subr.mxu0 0.0
      %706 = vmatpush1.msra.mxu0 %v566
      %707 = vmatprep.subr.mxu0 0.0
      %708 = vmatpush1.msra.mxu0 %v567
      %709 = vmatprep.subr.mxu0 0.0
      %710 = vmatpush1.msra.mxu0 %v568
      %711 = vmatprep.subr.mxu0 0.0
      %712 = vmatpush1.msra.mxu0 %v569
      %713 = vmatprep.subr.mxu0 0.0
      %714 = vmatpush1.msra.mxu0 %v570
      %715 = vmatprep.subr.mxu0 0.0
      %716 = vmatpush1.msra.mxu0 %v571
      %717 = vmatprep.subr.mxu0 0.0
      %718 = vmatpush1.msra.mxu0 %v572
      %719 = vmatprep.subr.mxu0 0.0
      %720 = vmatpush1.msra.mxu0 %v573
      %721 = vmatprep.subr.mxu0 0.0
      %722 = vmatpush1.msra.mxu0 %v574
      %723 = vmatprep.subr.mxu0 0.0
      %724 = vmatpush1.msra.mxu0 %v575
      %725 = vmatprep.subr.mxu0 0.0
      %726 = vmatpush1.msra.mxu0 %v576
      %727 = vmatprep.subr.mxu0 0.0
      %728 = vmatpush1.msra.mxu0 %v577
      %729 = vmatprep.subr.mxu0 0.0
      %730 = vmatpush1.msra.mxu0 %v578
      %731 = vmatprep.subr.mxu0 0.0
      %732 = vmatpush1.msra.mxu0 %v579
      %733 = vmatprep.subr.mxu0 0.0
      %734 = vmatpush1.msra.mxu0 %v580
      %735 = vmatprep.subr.mxu0 0.0
      %736 = vmatpush1.msra.mxu0 %v581
      %737 = vmatprep.subr.mxu0 0.0
      %738 = vmatpush1.msra.mxu0 %v582
      %739 = vmatprep.subr.mxu0 0.0
      %740 = vmatpush1.msra.mxu0 0.0
      %741 = vmatprep.subr.mxu0 0.0
      %742 = vmatpush1.msra.mxu0 0.0
      %743 = vmatprep.subr.mxu0 0.0
      %744 = vmatpush1.msra.mxu0 0.0
      %745 = vmatprep.subr.mxu0 0.0
      %746 = vmatpush1.msra.mxu0 0.0
      %747 = vmatprep.subr.mxu0 0.0
      %748 = vmatpush1.msra.mxu0 0.0
      %749 = vmatprep.subr.mxu0 0.0
      %750 = vmatpush1.msra.mxu0 0.0
      %751 = vmatprep.subr.mxu0 0.0
      %752 = vmatpush1.msra.mxu0 0.0
      %753 = vmatprep.subr.mxu0 0.0
      %754 = vmatpush1.msra.mxu0 0.0
      %755 = vmatprep.subr.mxu0 0.0
      %756 = vmatpush1.msra.mxu0 0.0
      %757 = vmatprep.subr.mxu0 0.0
      %758 = vmatpush1.msra.mxu0 0.0
      %759 = vmatprep.subr.mxu0 0.0
      %760 = vmatpush1.msra.mxu0 0.0
      %761 = vmatprep.subr.mxu0 0.0
      %762 = vmatpush1.msra.mxu0 0.0
      %763 = vmatprep.subr.mxu0 0.0
      %764 = vmatpush1.msra.mxu0 0.0
      %765 = vmatprep.subr.mxu0 0.0
      %766 = vmatpush1.msra.mxu0 0.0
      %767 = vmatprep.mubr.f32.mxu0 %v699
      %768 = vmatmul.mubr.f32.gmra.mrb[0].mxu0 %v558
      %v769 = vpop.f32.mrb[0].mxu0
      %v770 = vadd.f32 %v691, %v769
      %v771 = vpop.f32.mrb[0].mxu0
      %772 = vmatprep.mubr.f32.mxu0 %v701
      %773 = vmatmul.mubr.f32.gmra.mrb[0].mxu0 %v560
      %v774 = vpop.f32.mrb[0].mxu0
      %v775 = vadd.f32 %v696, %v774
      %v776 = vpop.f32.mrb[0].mxu0
      %777 = vdwg.mxu0
      %s778 = scalar_lea.vmem %s3, 288
      %v779 = vld [vmem:[%s778] sm:$0xff]
      %v780 = vld [vmem:[%s778 + $0x8] sm:$0xff]
      %v781 = vld [vmem:[%s778 + $0x10] sm:$0xff]
      %v782 = vld [vmem:[%s778 + $0x18] sm:$0xff]
      %v783 = vld [vmem:[%s778 + $0x20] sm:$0xff]
      %v784 = vld [vmem:[%s778 + $0x28] sm:$0xff]
      %v785 = vld [vmem:[%s778 + $0x30] sm:$0xff]
      %v786 = vld [vmem:[%s778 + $0x38] sm:$0xff]
      %v787 = vld [vmem:[%s778 + $0x40] sm:$0xff]
      %v788 = vld [vmem:[%s778 + $0x48] sm:$0xff]
      %v789 = vld [vmem:[%s778 + $0x50] sm:$0xff]
      %v790 = vld [vmem:[%s778 + $0x58] sm:$0xff]
      %v791 = vld [vmem:[%s778 + $0x60] sm:$0xff]
      %v792 = vld [vmem:[%s778 + $0x68] sm:$0xff]
      %v793 = vld [vmem:[%s778 + $0x70] sm:$0xff]
      %v794 = vld [vmem:[%s778 + $0x78] sm:$0xff]
      %v795 = vld [vmem:[%s778 + $0x80] sm:$0xff]
      %v796 = vld [vmem:[%s778 + $0x88] sm:$0xff]
      %v797 = vrot.slane %v558, 2
      %v798 = vrot.slane %v560, 2
      %v799 = vsel %vm426, %v797, %v798
      %v800 = vrot.slane %v559, 2
      %v801 = vrot.slane %v561, 2
      %v802 = vsel %vm426, %v800, %v801
      %v803 = vrot.slane %v562, 2
      %v804 = vsel %vm426, %v798, %v803
      %v805 = vrot.slane %v563, 2
      %v806 = vsel %vm426, %v801, %v805
      %v809 = vsel %vm524, %v802, 0
      %v811 = vsel %vm524, %v806, 0
      %813 = vmatprep.subr.mxu0 0.0
      %814 = vmatpush1.msra.mxu0 %v779
      %815 = vmatprep.subr.mxu0 0.0
      %816 = vmatpush1.msra.mxu0 %v780
      %817 = vmatprep.subr.mxu0 0.0
      %818 = vmatpush1.msra.mxu0 %v781
      %819 = vmatprep.subr.mxu0 0.0
      %820 = vmatpush1.msra.mxu0 %v782
      %821 = vmatprep.subr.mxu0 0.0
      %822 = vmatpush1.msra.mxu0 %v783
      %823 = vmatprep.subr.mxu0 0.0
      %824 = vmatpush1.msra.mxu0 %v784
      %825 = vmatprep.subr.mxu0 0.0
      %826 = vmatpush1.msra.mxu0 %v785
      %827 = vmatprep.subr.mxu0 0.0
      %828 = vmatpush1.msra.mxu0 %v786
      %829 = vmatprep.subr.mxu0 0.0
      %830 = vmatpush1.msra.mxu0 %v787
      %831 = vmatprep.subr.mxu0 0.0
      %832 = vmatpush1.msra.mxu0 %v788
      %833 = vmatprep.subr.mxu0 0.0
      %834 = vmatpush1.msra.mxu0 %v789
      %835 = vmatprep.subr.mxu0 0.0
      %836 = vmatpush1.msra.mxu0 %v790
      %837 = vmatprep.subr.mxu0 0.0
      %838 = vmatpush1.msra.mxu0 %v791
      %839 = vmatprep.subr.mxu0 0.0
      %840 = vmatpush1.msra.mxu0 %v792
      %841 = vmatprep.subr.mxu0 0.0
      %842 = vmatpush1.msra.mxu0 %v793
      %843 = vmatprep.subr.mxu0 0.0
      %844 = vmatpush1.msra.mxu0 %v794
      %845 = vmatprep.subr.mxu0 0.0
      %846 = vmatpush1.msra.mxu0 %v795
      %847 = vmatprep.subr.mxu0 0.0
      %848 = vmatpush1.msra.mxu0 %v796
      %849 = vmatprep.subr.mxu0 0.0
      %850 = vmatpush1.msra.mxu0 0.0
      %851 = vmatprep.subr.mxu0 0.0
      %852 = vmatpush1.msra.mxu0 0.0
      %853 = vmatprep.subr.mxu0 0.0
      %854 = vmatpush1.msra.mxu0 0.0
      %855 = vmatprep.subr.mxu0 0.0
      %856 = vmatpush1.msra.mxu0 0.0
      %857 = vmatprep.subr.mxu0 0.0
      %858 = vmatpush1.msra.mxu0 0.0
      %859 = vmatprep.subr.mxu0 0.0
      %860 = vmatpush1.msra.mxu0 0.0
      %861 = vmatprep.subr.mxu0 0.0
      %862 = vmatpush1.msra.mxu0 0.0
      %863 = vmatprep.subr.mxu0 0.0
      %864 = vmatpush1.msra.mxu0 0.0
      %865 = vmatprep.subr.mxu0 0.0
      %866 = vmatpush1.msra.mxu0 0.0
      %867 = vmatprep.subr.mxu0 0.0
      %868 = vmatpush1.msra.mxu0 0.0
      %869 = vmatprep.subr.mxu0 0.0
      %870 = vmatpush1.msra.mxu0 0.0
      %871 = vmatprep.subr.mxu0 0.0
      %872 = vmatpush1.msra.mxu0 0.0
      %873 = vmatprep.subr.mxu0 0.0
      %874 = vmatpush1.msra.mxu0 0.0
      %875 = vmatprep.subr.mxu0 0.0
      %876 = vmatpush1.msra.mxu0 0.0
      %877 = vmatprep.mubr.f32.mxu0 %v809
      %878 = vmatmul.mubr.f32.gmra.mrb[0].mxu0 %v799
      %v879 = vpop.f32.mrb[0].mxu0
      %v880 = vadd.f32 0.0, %v879
      %v881 = vpop.f32.mrb[0].mxu0
      %882 = vmatprep.mubr.f32.mxu0 %v811
      %883 = vmatmul.mubr.f32.gmra.mrb[0].mxu0 %v804
      %v884 = vpop.f32.mrb[0].mxu0
      %v885 = vadd.f32 0.0, %v884
      %v886 = vpop.f32.mrb[0].mxu0
      %887 = vdwg.mxu0
      %v888 = vadd.f32 %v770, %v880
      %v889 = vadd.f32 %v775, %v885
      %v891 = vlaneseq
      %v892 = vshrl.u32 %v891, 7
      %v893 = vsub.s32 0, %v892
      %v894 = vrot.slane %v564, %v893
      %v896 = vadd.f32 %v888, %v894
      %v897 = vadd.f32 %v889, %v894
      %v898 = vmax.f32 %v896, 0.0
      %v899 = vmax.f32 %v897, 0.0
      %900 = vst [vmem:[%s224] sm:$0xff] %v898
      %901 = vst [vmem:[%s224 + $0x8] sm:$0xff] %v899
      %p902 = scmp.lt.s32.totalorder %s16, 1
      %s903 = scalar_select %p902, %s16, 1
      %s904 = smul.addr %s903, 2
      %s905 = smul.addr %s904, 8
      %s906 = scalar_lea.vmem %s5, %s905
      // Predicated region
      $region41: #{r_block_forward.1} parent=39 // pred_check
        %p907 = pneg %p144
      $region42: #{r_block_forward.1} parent=39 // pred_check_branch
        %909 = sbr.rel (%p907) target = $region44
      $region43: #{r_block_forward.1} parent=39 // pred_region
        _
      $region44: #{r_block_forward.1} parent=39 // pred_fallthru
        _
    $region40: #{r_block_forward.1} parent=5 // pred_fallthru
      _
    %p910 = scmp.le.s32.totalorder 2, %s11
    // Predicated region
    $region45: #{r_block_forward.1} parent=5 // pred_check
      %p911 = pneg %p910
    $region46: #{r_block_forward.1} parent=5 // pred_check_branch
      %913 = sbr.rel (%p911) target = $region48
    $region47: #{r_block_forward.1} parent=5 // pred_region
      %s914 = ssub.s32 %s11, 2
      // Predicated region
      $region49: #{r_block_forward.1} parent=47 // pred_check
        %p915 = pneg %p150
      $region50: #{r_block_forward.1} parent=47 // pred_check_branch
        %917 = sbr.rel (%p915) target = $region52
      $region51: #{r_block_forward.1} parent=47 // pred_region
        %p918 = scmp.lt.s32.totalorder %s17, 1
        %s919 = scalar_select %p918, %s17, 1
        %s920 = smul.addr %s919, 2
        %s921 = smul.addr %s920, 8
        %s922 = scalar_lea.vmem %s5, %s921
      $region52: #{r_block_forward.1} parent=47 // pred_fallthru
        _
    $region48: #{r_block_forward.1} parent=5 // pred_fallthru
      _
  $region6: #{r_block_forward.1} parent=0 // loop_footer
    %s15 = sadd.s32 1, %s11
  $region7: #{r_block_forward.1} parent=0 // loop_footer_branch
    %10 = sbr.rel target = $region3
  $region8: #{r_block_forward.1} parent=0 // loop_exit
    _

</llo_original>
